<compile_context>
chip_gen: v7x
topology: tpu7x:2x2x1
jax: 0.10.0
libtpu: 0.0.40
codegen_flags: <defaults>
</compile_context>

<pallas_src>
import jax
import jax.numpy as jnp
from jax.experimental import pallas as pl
from jax.experimental.pallas import tpu as pltpu

HIDDEN = 3          # hidden_dim in the module (kernel is unrolled over it)
LANES = 1024        # lane-dense slab width (multiple of 128)
BLOCK_ROWS = 512    # rows per grid step for large inputs (multiple of 8)


def _mlp_kernel(p_ref, x_ref, o_ref):
    # p_ref: SMEM f32[10] = [w1_0, w1_1, w1_2, b1_0, b1_1, b1_2, w2_0, w2_1, w2_2, b2]
    # x_ref: VMEM (block_rows, LANES) input slab
    # o_ref: VMEM (block_rows, LANES) output slab
    x = x_ref[...].astype(jnp.float32)

    w1_0, w1_1, w1_2 = p_ref[0], p_ref[1], p_ref[2]
    b1_0, b1_1, b1_2 = p_ref[3], p_ref[4], p_ref[5]
    w2_0, w2_1, w2_2 = p_ref[6], p_ref[7], p_ref[8]
    b2 = p_ref[9]

    # Unrolled hidden units: pure VPU FMA + max, scalar operands splat to vregs.
    acc = w2_0 * jnp.maximum(w1_0 * x + b1_0, 0.0)
    acc = acc + w2_1 * jnp.maximum(w1_1 * x + b1_1, 0.0)
    acc = acc + w2_2 * jnp.maximum(w1_2 * x + b1_2, 0.0)
    acc = acc + b2

    o_ref[...] = acc.astype(o_ref.dtype)


def combine_feats_forward(x, params):
    """x: (..., 1) float array.  Returns same shape."""
    w1, b1, w2, b2 = params  # w1:(H,1) b1:(H,) w2:(1,H) b2:(1,)
    orig_shape = x.shape
    assert orig_shape[-1] == 1, "feature dim must be 1 (lin1 = Linear(1, H))"
    assert w1.shape[0] == HIDDEN, "kernel is unrolled for hidden_dim == 3"

    # Flatten to 1-D and pad to a lane-dense (rows_pad, LANES) slab.
    x_flat = x.reshape(-1)
    n = x_flat.shape[0]

    rows = pl.cdiv(n, LANES)
    block_rows = min(BLOCK_ROWS, pl.cdiv(rows, 8) * 8)   # single small block if tiny
    rows_pad = pl.cdiv(rows, block_rows) * block_rows
    total = rows_pad * LANES
    if total != n:
        x_flat = jnp.pad(x_flat, (0, total - n))
    x2d = x_flat.reshape(rows_pad, LANES)

    # Fold all weights/biases into 10 SMEM scalars.
    p = jnp.concatenate([
        w1.reshape(-1), b1.reshape(-1), w2.reshape(-1), b2.reshape(-1)
    ]).astype(jnp.float32)

    grid = (rows_pad // block_rows,)
    out = pl.pallas_call(
        _mlp_kernel,
        out_shape=jax.ShapeDtypeStruct((rows_pad, LANES), x.dtype),
        grid_spec=pltpu.PrefetchScalarGridSpec(
            num_scalar_prefetch=0,
            grid=grid,
            in_specs=[
                pl.BlockSpec(memory_space=pltpu.MemorySpace.SMEM),       # params (untiled, SMEM)
                pl.BlockSpec((block_rows, LANES), lambda i: (i, 0)),     # x slab
            ],
            out_specs=pl.BlockSpec((block_rows, LANES), lambda i: (i, 0)),
        ),
        compiler_params=pltpu.CompilerParams(
            dimension_semantics=("parallel",)),
    )(p, x2d)

    # Padded elements were computed but are sliced off here.
    return out.reshape(-1)[:n].reshape(orig_shape)


def init_params(key, hidden_dim=HIDDEN):
    """Deterministic init mimicking nn.Linear shapes:
       lin1: weight (H,1), bias (H,);  lin2: weight (1,H), bias (1,)."""
    k1, k2, k3, k4 = jax.random.split(key, 4)
    bound1 = 1.0  # 1/sqrt(in_features=1)
    w1 = jax.random.uniform(k1, (hidden_dim, 1), jnp.float32, -bound1, bound1)
    b1 = jax.random.uniform(k2, (hidden_dim,), jnp.float32, -bound1, bound1)
    bound2 = 1.0 / jnp.sqrt(float(hidden_dim))
    w2 = jax.random.uniform(k3, (1, hidden_dim), jnp.float32, -bound2, bound2)
    b2 = jax.random.uniform(k4, (1,), jnp.float32, -bound2, bound2)
    return (w1, b1, w2, b2)


def reference_forward(x, params):
    """Pure-JAX reference identical to the PyTorch forward (eval mode)."""
    w1, b1, w2, b2 = params
    h = x @ w1.T + b1           # (..., H)
    h = jax.nn.relu(h)
    y = h @ w2.T + b2           # (..., 1)
    return y


if __name__ == "__main__":
    key = jax.random.PRNGKey(0)
    pk, xk = jax.random.split(key)
    params = init_params(pk)

    # Small input consistent with the module: batch=2, seq=8, feat_dim=1.
    x = jax.random.normal(xk, (2, 8, 1), dtype=jnp.float32)

    y = combine_feats_forward(x, params)
    y = jax.block_until_ready(y)

    y_ref = reference_forward(x, params)
    assert y.shape == x.shape
    assert jnp.allclose(y, y_ref, atol=1e-5, rtol=1e-5), "mismatch vs reference"

    print("KERNEL_OK")
</pallas_src>

<mosaic_0001>
module attributes {stable_mosaic.version = 11 : i64} {
  func.func @_mlp_kernel(%arg0: i32, %arg1: memref<10xf32, #tpu.memory_space<smem>>, %arg2: memref<8x1024xf32, #tpu.memory_space<vmem>>, %arg3: memref<8x1024xf32, #tpu.memory_space<vmem>>) attributes {dimension_semantics = [#tpu.dimension_semantics<parallel>], iteration_bounds = array<i64: 1>, scalar_prefetch = 0 : i64, scratch_operands = 0 : i64, tpu.core_type = #tpu.core_type<tc>, window_params = [{transform_indices = @transform_0, window_bounds = array<i64: 10>}, {transform_indices = @transform_1, window_bounds = array<i64: 8, 1024>}, {transform_indices = @transform_2, window_bounds = array<i64: 8, 1024>}]} {
    %c0 = arith.constant 0 : index
    %c0_0 = arith.constant 0 : index
    %0 = vector.load %arg2[%c0, %c0_0] : memref<8x1024xf32, #tpu.memory_space<vmem>>, vector<8x1024xf32>
    %c0_1 = arith.constant 0 : index
    %1 = memref.load %arg1[%c0_1] : memref<10xf32, #tpu.memory_space<smem>>
    %c1 = arith.constant 1 : index
    %2 = memref.load %arg1[%c1] : memref<10xf32, #tpu.memory_space<smem>>
    %c2 = arith.constant 2 : index
    %3 = memref.load %arg1[%c2] : memref<10xf32, #tpu.memory_space<smem>>
    %c3 = arith.constant 3 : index
    %4 = memref.load %arg1[%c3] : memref<10xf32, #tpu.memory_space<smem>>
    %c4 = arith.constant 4 : index
    %5 = memref.load %arg1[%c4] : memref<10xf32, #tpu.memory_space<smem>>
    %c5 = arith.constant 5 : index
    %6 = memref.load %arg1[%c5] : memref<10xf32, #tpu.memory_space<smem>>
    %c6 = arith.constant 6 : index
    %7 = memref.load %arg1[%c6] : memref<10xf32, #tpu.memory_space<smem>>
    %c7 = arith.constant 7 : index
    %8 = memref.load %arg1[%c7] : memref<10xf32, #tpu.memory_space<smem>>
    %c8 = arith.constant 8 : index
    %9 = memref.load %arg1[%c8] : memref<10xf32, #tpu.memory_space<smem>>
    %c9 = arith.constant 9 : index
    %10 = memref.load %arg1[%c9] : memref<10xf32, #tpu.memory_space<smem>>
    %11 = vector.broadcast %1 : f32 to vector<8x1024xf32>
    %12 = arith.mulf %11, %0 : vector<8x1024xf32>
    %13 = vector.broadcast %4 : f32 to vector<8x1024xf32>
    %14 = arith.addf %12, %13 : vector<8x1024xf32>
    %cst = arith.constant 0.000000e+00 : f32
    %15 = vector.broadcast %cst : f32 to vector<8x1024xf32>
    %16 = arith.maximumf %14, %15 : vector<8x1024xf32>
    %17 = vector.broadcast %7 : f32 to vector<8x1024xf32>
    %18 = arith.mulf %17, %16 : vector<8x1024xf32>
    %19 = vector.broadcast %2 : f32 to vector<8x1024xf32>
    %20 = arith.mulf %19, %0 : vector<8x1024xf32>
    %21 = vector.broadcast %5 : f32 to vector<8x1024xf32>
    %22 = arith.addf %20, %21 : vector<8x1024xf32>
    %cst_2 = arith.constant 0.000000e+00 : f32
    %23 = vector.broadcast %cst_2 : f32 to vector<8x1024xf32>
    %24 = arith.maximumf %22, %23 : vector<8x1024xf32>
    %25 = vector.broadcast %8 : f32 to vector<8x1024xf32>
    %26 = arith.mulf %25, %24 : vector<8x1024xf32>
    %27 = arith.addf %18, %26 : vector<8x1024xf32>
    %28 = vector.broadcast %3 : f32 to vector<8x1024xf32>
    %29 = arith.mulf %28, %0 : vector<8x1024xf32>
    %30 = vector.broadcast %6 : f32 to vector<8x1024xf32>
    %31 = arith.addf %29, %30 : vector<8x1024xf32>
    %cst_3 = arith.constant 0.000000e+00 : f32
    %32 = vector.broadcast %cst_3 : f32 to vector<8x1024xf32>
    %33 = arith.maximumf %31, %32 : vector<8x1024xf32>
    %34 = vector.broadcast %9 : f32 to vector<8x1024xf32>
    %35 = arith.mulf %34, %33 : vector<8x1024xf32>
    %36 = arith.addf %27, %35 : vector<8x1024xf32>
    %37 = vector.broadcast %10 : f32 to vector<8x1024xf32>
    %38 = arith.addf %36, %37 : vector<8x1024xf32>
    %c0_4 = arith.constant 0 : index
    %c0_5 = arith.constant 0 : index
    %39 = vector.load %arg3[%c0_4, %c0_5] : memref<8x1024xf32, #tpu.memory_space<vmem>>, vector<8x1024xf32>
    tpu.vector_store %arg3[%c0_4, %c0_5], %38 {strides = array<i32>} : memref<8x1024xf32, #tpu.memory_space<vmem>>, vector<8x1024xf32>,
    return
  }
  func.func @transform_0(%arg0: i32) -> i32 {
    %c0_i32 = arith.constant 0 : i32
    %c0_i32_0 = arith.constant 0 : i32
    return %c0_i32 : i32
  }
  func.func @transform_1(%arg0: i32) -> (i32, i32) {
    %c0_i32 = arith.constant 0 : i32
    %c0_i32_0 = arith.constant 0 : i32
    return %arg0, %c0_i32 : i32, i32
  }
  func.func @transform_2(%arg0: i32) -> (i32, i32) {
    %c0_i32 = arith.constant 0 : i32
    %c0_i32_0 = arith.constant 0 : i32
    return %arg0, %c0_i32 : i32, i32
  }
}

</mosaic_0001>

<llo_original>
// kernel: tpu_custom_call.1
$region0: #{tpu_custom_call.1}
  #allocation0 [shape = 'u32[]', space=smem, size = 0x4, offset = 0x4, fixed_abs, tag = 'smem constant byte address 0x4 - core index']
  #allocation1 [shape = 'u32[144,128]{1,0:T(1,128)}', space=vmem, size = 0x12000, scoped, tag = 'internal scratch']
  %s0 = inlined_call_operand.hbm [shape: f32[10], index: 0, kind: input, shape index: {}]
  %s1 = inlined_call_operand.hbm [shape: f32[8,1024], index: 1, kind: input, shape index: {}]
  %s2 = inlined_call_operand.hbm [shape: f32[8,1024], index: 2, kind: output, shape index: {}]
  %s3 = sld [smem:[#allocation0]]
  $region26: #{tpu_custom_call.1} parent=0
    _
  %s5 = ssub.s32 1, %s3
  %s6 = scalar_select 0, %s5, %s3
  $region1: #{tpu_custom_call.1} parent=0
    #allocation2 [shape = 'u8[512]{0}', space=smem, size = 0x200, scoped, tag = 'input window, operand 0, single buffered']
    #allocation3 [shape = 's32[1]{0}', space=sflag, size = 0x4, scoped, tag = 'scoped memory for tpu_custom_call.1']
    #allocation4 [shape = 's32[1]{0}', space=sflag, size = 0x4, scoped, tag = 'scoped memory for tpu_custom_call.1']
    #allocation5 [shape = 's32[1]{0}', space=sflag, size = 0x4, scoped, tag = 'scoped memory for tpu_custom_call.1']
    #allocation6 [shape = 'u8[32768]{0}', space=vmem, size = 0x8000, scoped, tag = 'input window, operand 1, single buffered']
    #allocation7 [shape = 'u8[32768]{0}', space=vmem, size = 0x8000, scoped, tag = 'output window, operand 0, single buffered']
    %7 = vsyncpa [#allocation5], 0
    %8 = vsyncpa [#allocation3], 0
    %9 = vsyncpa [#allocation4], 0
    // Predicated region
    $region2: #{tpu_custom_call.1} parent=1 // pred_check
      _
    $region3: #{tpu_custom_call.1} parent=1 // pred_check_branch
      %11 = sbr.rel (0) target = $region5
    $region4: #{tpu_custom_call.1} parent=1 // pred_region
      %s13 = ssub.s32 16, 16
      %14 = vsyncadd [#allocation5], %s13
      %17 = dma.hbm_to_smem %s0, 16, [#allocation2], [#allocation5]
    $region5: #{tpu_custom_call.1} parent=1 // pred_fallthru
      _
    // Predicated region
    $region6: #{tpu_custom_call.1} parent=1 // pred_check
      _
    $region7: #{tpu_custom_call.1} parent=1 // pred_check_branch
      %19 = sbr.rel (0) target = $region9
    $region8: #{tpu_custom_call.1} parent=1 // pred_region
      %s21 = ssub.s32 1024, 1024
      %22 = vsyncadd [#allocation3], %s21
      %s24 = sshll.u32 [#allocation6], 4
      %s25 = int_to_ptr.vmem [resolvable:$true] %s24
      %27 = dma.hbm_to_vmem [thread:$0]  %s1, 1024, %s25, [#allocation3]
    $region9: #{tpu_custom_call.1} parent=1 // pred_fallthru
      _
    // Predicated region
    $region10: #{tpu_custom_call.1} parent=1 // pred_check
      _
    $region11: #{tpu_custom_call.1} parent=1 // pred_check_branch
      %29 = sbr.rel (0) target = $region13
    $region12: #{tpu_custom_call.1} parent=1 // pred_region
      %30 = dma.done [#allocation5], 16
    $region13: #{tpu_custom_call.1} parent=1 // pred_fallthru
      _
    // Predicated region
    $region14: #{tpu_custom_call.1} parent=1 // pred_check
      _
    $region15: #{tpu_custom_call.1} parent=1 // pred_check_branch
      %32 = sbr.rel (0) target = $region17
    $region16: #{tpu_custom_call.1} parent=1 // pred_region
      %33 = dma.done [#allocation3], 1024
    $region17: #{tpu_custom_call.1} parent=1 // pred_fallthru
      _
    %34 = sfence
    %v35 = vld [vmem:[#allocation6] sm:$0xff]
    %v36 = vld [vmem:[#allocation6 + $0x8] sm:$0xff]
    %v37 = vld [vmem:[#allocation6 + $0x10] sm:$0xff]
    %v38 = vld [vmem:[#allocation6 + $0x18] sm:$0xff]
    %v39 = vld [vmem:[#allocation6 + $0x20] sm:$0xff]
    %v40 = vld [vmem:[#allocation6 + $0x28] sm:$0xff]
    %v41 = vld [vmem:[#allocation6 + $0x30] sm:$0xff]
    %v42 = vld [vmem:[#allocation6 + $0x38] sm:$0xff]
    %s43 = sld [smem:[#allocation2]]
    %s44 = sld [smem:[#allocation2 + $0x1]]
    %s45 = sld [smem:[#allocation2 + $0x2]]
    %s46 = sld [smem:[#allocation2 + $0x3]]
    %s47 = sld [smem:[#allocation2 + $0x4]]
    %s48 = sld [smem:[#allocation2 + $0x5]]
    %s49 = sld [smem:[#allocation2 + $0x6]]
    %s50 = sld [smem:[#allocation2 + $0x7]]
    %s51 = sld [smem:[#allocation2 + $0x8]]
    %s52 = sld [smem:[#allocation2 + $0x9]]
    %v53 = vstv %s43
    %v54 = vmul.f32 %v53, %v35
    %v55 = vmul.f32 %v53, %v36
    %v56 = vmul.f32 %v53, %v37
    %v57 = vmul.f32 %v53, %v38
    %v58 = vmul.f32 %v53, %v39
    %v59 = vmul.f32 %v53, %v40
    %v60 = vmul.f32 %v53, %v41
    %v61 = vmul.f32 %v53, %v42
    %v62 = vstv %s46
    %v63 = vadd.f32 %v54, %v62
    %v64 = vadd.f32 %v55, %v62
    %v65 = vadd.f32 %v56, %v62
    %v66 = vadd.f32 %v57, %v62
    %v67 = vadd.f32 %v58, %v62
    %v68 = vadd.f32 %v59, %v62
    %v69 = vadd.f32 %v60, %v62
    %v70 = vadd.f32 %v61, %v62
    %v71 = vmax.f32 %v63, 0.0
    %v72 = vmax.f32 %v64, 0.0
    %v73 = vmax.f32 %v65, 0.0
    %v74 = vmax.f32 %v66, 0.0
    %v75 = vmax.f32 %v67, 0.0
    %v76 = vmax.f32 %v68, 0.0
    %v77 = vmax.f32 %v69, 0.0
    %v78 = vmax.f32 %v70, 0.0
    %v79 = vstv %s49
    %v80 = vmul.f32 %v79, %v71
    %v81 = vmul.f32 %v79, %v72
    %v82 = vmul.f32 %v79, %v73
    %v83 = vmul.f32 %v79, %v74
    %v84 = vmul.f32 %v79, %v75
    %v85 = vmul.f32 %v79, %v76
    %v86 = vmul.f32 %v79, %v77
    %v87 = vmul.f32 %v79, %v78
    %v88 = vstv %s44
    %v89 = vmul.f32 %v88, %v35
    %v90 = vmul.f32 %v88, %v36
    %v91 = vmul.f32 %v88, %v37
    %v92 = vmul.f32 %v88, %v38
    %v93 = vmul.f32 %v88, %v39
    %v94 = vmul.f32 %v88, %v40
    %v95 = vmul.f32 %v88, %v41
    %v96 = vmul.f32 %v88, %v42
    %v97 = vstv %s47
    %v98 = vadd.f32 %v89, %v97
    %v99 = vadd.f32 %v90, %v97
    %v100 = vadd.f32 %v91, %v97
    %v101 = vadd.f32 %v92, %v97
    %v102 = vadd.f32 %v93, %v97
    %v103 = vadd.f32 %v94, %v97
    %v104 = vadd.f32 %v95, %v97
    %v105 = vadd.f32 %v96, %v97
    %v106 = vmax.f32 %v98, 0.0
    %v107 = vmax.f32 %v99, 0.0
    %v108 = vmax.f32 %v100, 0.0
    %v109 = vmax.f32 %v101, 0.0
    %v110 = vmax.f32 %v102, 0.0
    %v111 = vmax.f32 %v103, 0.0
    %v112 = vmax.f32 %v104, 0.0
    %v113 = vmax.f32 %v105, 0.0
    %v114 = vstv %s50
    %v115 = vmul.f32 %v114, %v106
    %v116 = vmul.f32 %v114, %v107
    %v117 = vmul.f32 %v114, %v108
    %v118 = vmul.f32 %v114, %v109
    %v119 = vmul.f32 %v114, %v110
    %v120 = vmul.f32 %v114, %v111
    %v121 = vmul.f32 %v114, %v112
    %v122 = vmul.f32 %v114, %v113
    %v123 = vadd.f32 %v80, %v115
    %v124 = vadd.f32 %v81, %v116
    %v125 = vadd.f32 %v82, %v117
    %v126 = vadd.f32 %v83, %v118
    %v127 = vadd.f32 %v84, %v119
    %v128 = vadd.f32 %v85, %v120
    %v129 = vadd.f32 %v86, %v121
    %v130 = vadd.f32 %v87, %v122
    %v131 = vstv %s45
    %v132 = vmul.f32 %v131, %v35
    %v133 = vmul.f32 %v131, %v36
    %v134 = vmul.f32 %v131, %v37
    %v135 = vmul.f32 %v131, %v38
    %v136 = vmul.f32 %v131, %v39
    %v137 = vmul.f32 %v131, %v40
    %v138 = vmul.f32 %v131, %v41
    %v139 = vmul.f32 %v131, %v42
    %v140 = vstv %s48
    %v141 = vadd.f32 %v132, %v140
    %v142 = vadd.f32 %v133, %v140
    %v143 = vadd.f32 %v134, %v140
    %v144 = vadd.f32 %v135, %v140
    %v145 = vadd.f32 %v136, %v140
    %v146 = vadd.f32 %v137, %v140
    %v147 = vadd.f32 %v138, %v140
    %v148 = vadd.f32 %v139, %v140
    %v149 = vmax.f32 %v141, 0.0
    %v150 = vmax.f32 %v142, 0.0
    %v151 = vmax.f32 %v143, 0.0
    %v152 = vmax.f32 %v144, 0.0
    %v153 = vmax.f32 %v145, 0.0
    %v154 = vmax.f32 %v146, 0.0
    %v155 = vmax.f32 %v147, 0.0
    %v156 = vmax.f32 %v148, 0.0
    %v157 = vstv %s51
    %v158 = vmul.f32 %v157, %v149
    %v159 = vmul.f32 %v157, %v150
    %v160 = vmul.f32 %v157, %v151
    %v161 = vmul.f32 %v157, %v152
    %v162 = vmul.f32 %v157, %v153
    %v163 = vmul.f32 %v157, %v154
    %v164 = vmul.f32 %v157, %v155
    %v165 = vmul.f32 %v157, %v156
    %v166 = vadd.f32 %v123, %v158
    %v167 = vadd.f32 %v124, %v159
    %v168 = vadd.f32 %v125, %v160
    %v169 = vadd.f32 %v126, %v161
    %v170 = vadd.f32 %v127, %v162
    %v171 = vadd.f32 %v128, %v163
    %v172 = vadd.f32 %v129, %v164
    %v173 = vadd.f32 %v130, %v165
    %v174 = vstv %s52
    %v175 = vadd.f32 %v166, %v174
    %v176 = vadd.f32 %v167, %v174
    %v177 = vadd.f32 %v168, %v174
    %v178 = vadd.f32 %v169, %v174
    %v179 = vadd.f32 %v170, %v174
    %v180 = vadd.f32 %v171, %v174
    %v181 = vadd.f32 %v172, %v174
    %v182 = vadd.f32 %v173, %v174
    %183 = vst [vmem:[#allocation7] sm:$0xff] %v175
    %184 = vst [vmem:[#allocation7 + $0x8] sm:$0xff] %v176
    %185 = vst [vmem:[#allocation7 + $0x10] sm:$0xff] %v177
    %186 = vst [vmem:[#allocation7 + $0x18] sm:$0xff] %v178
    %187 = vst [vmem:[#allocation7 + $0x20] sm:$0xff] %v179
    %188 = vst [vmem:[#allocation7 + $0x28] sm:$0xff] %v180
    %189 = vst [vmem:[#allocation7 + $0x30] sm:$0xff] %v181
    %190 = vst [vmem:[#allocation7 + $0x38] sm:$0xff] %v182
    // Predicated region
    $region18: #{tpu_custom_call.1} parent=1 // pred_check
      _
    $region19: #{tpu_custom_call.1} parent=1 // pred_check_branch
      %192 = sbr.rel (0) target = $region21
    $region20: #{tpu_custom_call.1} parent=1 // pred_region
      %s194 = ssub.s32 1024, 1024
      %195 = vsyncadd [#allocation4], %s194
      %s197 = sshll.u32 [#allocation7], 4
      %s198 = int_to_ptr.vmem [resolvable:$true] %s197
      %200 = dma.vmem_to_hbm [thread:$0]  %s198, 1024, %s2, [#allocation4]
    $region21: #{tpu_custom_call.1} parent=1 // pred_fallthru
      _
    // Predicated region
    $region22: #{tpu_custom_call.1} parent=1 // pred_check
      _
    $region23: #{tpu_custom_call.1} parent=1 // pred_check_branch
      %202 = sbr.rel (0) target = $region25
    $region24: #{tpu_custom_call.1} parent=1 // pred_region
      %203 = dma.done [#allocation4], 1024
    $region25: #{tpu_custom_call.1} parent=1 // pred_fallthru
      _
    %204 = vsyncpa [#allocation3], 1
    %205 = vsyncpa [#allocation4], 1
    %206 = vsyncpa [#allocation5], 1

</llo_original>
